<compile_context>
chip_gen: v7x
topology: tpu7x:2x2x1
jax: 0.10.0
libtpu: 0.0.40
codegen_flags: <defaults>
</compile_context>

<pallas_src>
import math
import jax
import jax.numpy as jnp
from jax.experimental import pallas as pl
from jax.experimental.pallas import tpu as pltpu


def _round_up(x, m):
    return ((x + m - 1) // m) * m


def adversarial_kernel(x_ref, w1_ref, b1_ref, w3_ref, b3_ref, o_ref):
    # Layer 1: bf16 MXU matmul with f32 accumulation, then f32 bias + ReLU on the VPU.
    h = jnp.dot(x_ref[...], w1_ref[...], preferred_element_type=jnp.float32)
    h = jnp.maximum(h + b1_ref[...], 0.0)
    # Layer 3 (H -> 1): VPU multiply + lane reduction instead of an N=1 MXU matmul.
    logit = jnp.sum(h * w3_ref[...], axis=-1, keepdims=True) + b3_ref[0, 0]
    o_ref[...] = jax.nn.sigmoid(logit).astype(o_ref.dtype)


def adversarial_network_forward(x, w1, b1, w3, b3, *, block_b=256):
    """x: (B, in_feature); w1: (in_feature, H); b1: (H,)|(1,H); w3: (H, 1); b3: scalar-like."""
    B, F = x.shape
    H = w1.shape[1]

    # bf16 matmul operands (full-rate MXU on v6e/v7x, half the weight-streaming bytes);
    # accumulation and all elementwise math remain f32.
    xb = x.astype(jnp.bfloat16)
    w1b = w1.astype(jnp.bfloat16)
    b1r = jnp.reshape(b1, (1, H)).astype(jnp.float32)
    w3r = jnp.reshape(w3, (1, H)).astype(jnp.float32)   # (H,1) column -> (1,H) row for VPU reduce
    b3s = jnp.reshape(b3, (1, 1)).astype(jnp.float32)

    # Batch tile: big enough to pipeline, sublane-aligned; pad B so there is no partial tile.
    tb = min(block_b, _round_up(B, 8))
    b_pad = _round_up(B, tb)
    if b_pad != B:
        xb = jnp.pad(xb, ((0, b_pad - B), (0, 0)))
    grid = (b_pad // tb,)

    # VMEM budget: resident weights + double-buffered x/out tiles + f32 intermediate.
    vmem_bytes = (
        2 * tb * F * 2      # double-buffered bf16 x tiles
        + 2 * tb * 4        # double-buffered f32 output tiles
        + F * H * 2         # resident bf16 w1
        + 2 * H * 4         # resident f32 b1 and w3 row
        + 2 * tb * H * 4    # f32 hidden activations + headroom
    )
    vmem_limit = int(min(64 << 20, max(32 << 20, 2 * vmem_bytes)))

    out = pl.pallas_call(
        adversarial_kernel,
        out_shape=jax.ShapeDtypeStruct((b_pad, 1), jnp.float32),
        grid=grid,
        in_specs=[
            pl.BlockSpec((tb, F), lambda i: (i, 0)),                    # x: batch-tiled, pipelined
            pl.BlockSpec((F, H), lambda i: (0, 0)),                     # w1: VMEM-resident
            pl.BlockSpec((1, H), lambda i: (0, 0)),                     # b1: VMEM-resident
            pl.BlockSpec((1, H), lambda i: (0, 0)),                     # w3 row: VMEM-resident
            pl.BlockSpec(memory_space=pltpu.MemorySpace.SMEM),          # b3: scalar in SMEM
        ],
        out_specs=pl.BlockSpec((tb, 1), lambda i: (i, 0)),
        compiler_params=pltpu.CompilerParams(
            dimension_semantics=("parallel",),
            vmem_limit_bytes=vmem_limit,
        ),
    )(xb, w1b, b1r, w3r, b3s)
    return out[:B]


def init_params(key, in_feature, hidden_size):
    """Mirrors init_weights(): xavier_normal_ on Linear weights, zero biases.
    Weights are stored pre-transposed ((in, out)) for the kernel."""
    k1, k3 = jax.random.split(key, 2)
    std1 = math.sqrt(2.0 / (in_feature + hidden_size))
    std3 = math.sqrt(2.0 / (hidden_size + 1))
    w1 = jax.random.normal(k1, (in_feature, hidden_size), jnp.float32) * std1
    b1 = jnp.zeros((hidden_size,), jnp.float32)
    w3 = jax.random.normal(k3, (hidden_size, 1), jnp.float32) * std3
    b3 = jnp.zeros((1, 1), jnp.float32)
    return w1, b1, w3, b3


def reference_forward(x, w1, b1, w3, b3):
    # Same numerics as the kernel: bf16 layer-1 operands, f32 accumulation/elementwise.
    h = jnp.dot(x.astype(jnp.bfloat16), w1.astype(jnp.bfloat16),
                preferred_element_type=jnp.float32)
    h = jnp.maximum(h + b1.reshape(1, -1), 0.0)
    return jax.nn.sigmoid(h @ w3 + b3.reshape(1, 1))


if __name__ == "__main__":
    # Small shapes consistent with the module (batch x in_feature -> hidden -> 1).
    B, IN_FEATURE, HIDDEN = 16, 256, 128
    key = jax.random.PRNGKey(0)
    kx, kp = jax.random.split(key)

    x = jax.random.normal(kx, (B, IN_FEATURE), jnp.float32)
    w1, b1, w3, b3 = init_params(kp, IN_FEATURE, HIDDEN)

    # NOTE: forward also computes calc_coeff(iter_num, ...) for the GRL backward hook;
    # it does not change the forward value (x * 1.0 is identity), so it is omitted here.
    # TODO(synk): gradient-reversal hook (grl_hook) is backward-only; no forward equivalent.

    y = adversarial_network_forward(x, w1, b1, w3, b3)
    y = jax.block_until_ready(y)

    y_ref = reference_forward(x, w1, b1, w3, b3)
    assert y.shape == (B, 1)
    assert jnp.allclose(y, y_ref, atol=1e-4, rtol=1e-4), "mismatch vs reference"

    print("KERNEL_OK")
</pallas_src>

<mosaic_0001>
module attributes {stable_mosaic.version = 11 : i64} {
  func.func @adversarial_kernel(%arg0: i32, %arg1: memref<16x256xbf16, #tpu.memory_space<vmem>>, %arg2: memref<256x128xbf16, #tpu.memory_space<vmem>>, %arg3: memref<1x128xf32, #tpu.memory_space<vmem>>, %arg4: memref<1x128xf32, #tpu.memory_space<vmem>>, %arg5: memref<1x1xf32, #tpu.memory_space<smem>>, %arg6: memref<16x1xf32, #tpu.memory_space<vmem>>) attributes {dimension_semantics = [#tpu.dimension_semantics<parallel>], iteration_bounds = array<i64: 1>, scalar_prefetch = 0 : i64, scratch_operands = 0 : i64, tpu.core_type = #tpu.core_type<tc>, window_params = [{transform_indices = @transform_0, window_bounds = array<i64: 16, 256>}, {pipeline_mode = #tpu.pipeline_mode<synchronous>, transform_indices = @transform_1, window_bounds = array<i64: 256, 128>}, {pipeline_mode = #tpu.pipeline_mode<synchronous>, transform_indices = @transform_2, window_bounds = array<i64: 1, 128>}, {pipeline_mode = #tpu.pipeline_mode<synchronous>, transform_indices = @transform_3, window_bounds = array<i64: 1, 128>}, {transform_indices = @transform_4, window_bounds = array<i64: 1, 1>}, {transform_indices = @transform_5, window_bounds = array<i64: 16, 1>}]} {
    %c0 = arith.constant 0 : index
    %c0_0 = arith.constant 0 : index
    %0 = vector.load %arg1[%c0, %c0_0] : memref<16x256xbf16, #tpu.memory_space<vmem>>, vector<16x256xbf16>
    %c0_1 = arith.constant 0 : index
    %c0_2 = arith.constant 0 : index
    %1 = vector.load %arg2[%c0_1, %c0_2] : memref<256x128xbf16, #tpu.memory_space<vmem>>, vector<256x128xbf16>
    %cst = arith.constant dense<0.000000e+00> : vector<16x128xf32>
    %2 = tpu.matmul %0, %1, %cst {dimension_numbers = #tpu.dot_dimension_numbers<[1], [0], [0], [1], [0, 0, 1, 1], [], []>} : vector<16x256xbf16>, vector<256x128xbf16>, vector<16x128xf32> -> vector<16x128xf32>
    %c0_3 = arith.constant 0 : index
    %c0_4 = arith.constant 0 : index
    %3 = vector.load %arg3[%c0_3, %c0_4] : memref<1x128xf32, #tpu.memory_space<vmem>>, vector<1x128xf32>
    %4 = vector.broadcast %3 : vector<1x128xf32> to vector<16x128xf32>
    %5 = arith.addf %2, %4 : vector<16x128xf32>
    %cst_5 = arith.constant 0.000000e+00 : f32
    %6 = vector.broadcast %cst_5 : f32 to vector<16x128xf32>
    %7 = arith.maximumf %5, %6 : vector<16x128xf32>
    %c0_6 = arith.constant 0 : index
    %c0_7 = arith.constant 0 : index
    %8 = vector.load %arg4[%c0_6, %c0_7] : memref<1x128xf32, #tpu.memory_space<vmem>>, vector<1x128xf32>
    %9 = vector.broadcast %8 : vector<1x128xf32> to vector<16x128xf32>
    %10 = arith.mulf %7, %9 : vector<16x128xf32>
    %cst_8 = arith.constant dense<0.000000e+00> : vector<16xf32>
    %11 = vector.multi_reduction <add>, %10, %cst_8 [1] : vector<16x128xf32> to vector<16xf32>
    %12 = vector.shape_cast %11 : vector<16xf32> to vector<16x1xf32>
    %c0_9 = arith.constant 0 : index
    %c0_10 = arith.constant 0 : index
    %13 = memref.load %arg5[%c0_9, %c0_10] : memref<1x1xf32, #tpu.memory_space<smem>>
    %14 = vector.broadcast %13 : f32 to vector<16x1xf32>
    %15 = arith.addf %12, %14 : vector<16x1xf32>
    %16 = arith.negf %15 : vector<16x1xf32>
    %17 = math.exp %16 : vector<16x1xf32>
    %cst_11 = arith.constant 1.000000e+00 : f32
    %18 = vector.broadcast %cst_11 : f32 to vector<16x1xf32>
    %19 = arith.addf %18, %17 : vector<16x1xf32>
    %20 = arith.divf %18, %19 : vector<16x1xf32>
    %c0_12 = arith.constant 0 : index
    %c0_13 = arith.constant 0 : index
    %21 = vector.load %arg6[%c0_12, %c0_13] : memref<16x1xf32, #tpu.memory_space<vmem>>, vector<16x1xf32>
    tpu.vector_store %arg6[%c0_12, %c0_13], %20 {strides = array<i32>} : memref<16x1xf32, #tpu.memory_space<vmem>>, vector<16x1xf32>,
    return
  }
  func.func @transform_0(%arg0: i32) -> (i32, i32) {
    %c0_i32 = arith.constant 0 : i32
    %c0_i32_0 = arith.constant 0 : i32
    return %arg0, %c0_i32 : i32, i32
  }
  func.func @transform_1(%arg0: i32) -> (i32, i32) {
    %c0_i32 = arith.constant 0 : i32
    %c0_i32_0 = arith.constant 0 : i32
    %c0_i32_1 = arith.constant 0 : i32
    return %c0_i32, %c0_i32_0 : i32, i32
  }
  func.func @transform_2(%arg0: i32) -> (i32, i32) {
    %c0_i32 = arith.constant 0 : i32
    %c0_i32_0 = arith.constant 0 : i32
    %c0_i32_1 = arith.constant 0 : i32
    return %c0_i32, %c0_i32_0 : i32, i32
  }
  func.func @transform_3(%arg0: i32) -> (i32, i32) {
    %c0_i32 = arith.constant 0 : i32
    %c0_i32_0 = arith.constant 0 : i32
    %c0_i32_1 = arith.constant 0 : i32
    return %c0_i32, %c0_i32_0 : i32, i32
  }
  func.func @transform_4(%arg0: i32) -> (i32, i32) {
    %c0_i32 = arith.constant 0 : i32
    %c0_i32_0 = arith.constant 0 : i32
    %c0_i32_1 = arith.constant 0 : i32
    return %c0_i32, %c0_i32_0 : i32, i32
  }
  func.func @transform_5(%arg0: i32) -> (i32, i32) {
    %c0_i32 = arith.constant 0 : i32
    %c0_i32_0 = arith.constant 0 : i32
    return %arg0, %c0_i32 : i32, i32
  }
}

</mosaic_0001>

<llo_original>
// kernel: tpu_custom_call.1
$region0: #{tpu_custom_call.1}
  #allocation0 [shape = 'u32[]', space=smem, size = 0x4, offset = 0x4, fixed_abs, tag = 'smem constant byte address 0x4 - core index']
  #allocation1 [shape = 'u32[144,128]{1,0:T(1,128)}', space=vmem, size = 0x12000, scoped, tag = 'internal scratch']
  #allocation2 [shape = 'f32[1,1]{1,0:T(1,128)S(6)}', space=smem, size = 0x200, scoped, tag = 'scoped memory for tpu_custom_call.1']
  %s0 = inlined_call_operand.hbm [shape: bf16[16,256], index: 0, kind: input, shape index: {}]
  %s1 = inlined_call_operand.hbm [shape: bf16[256,128], index: 1, kind: input, shape index: {}]
  %s2 = inlined_call_operand.vmem [shape: f32[1,128], index: 2, kind: input, shape index: {}]
  %s3 = inlined_call_operand.vmem [shape: f32[1,128], index: 3, kind: input, shape index: {}]
  %s4 = inlined_call_operand.<no memory space> [shape: f32[1,1], index: 4, kind: input, shape index: {}]
  %s5 = inlined_call_operand.vmem [shape: f32[16,1], index: 5, kind: output, shape index: {}]
  %s6 = sld [smem:[#allocation0]]
  $region38: #{tpu_custom_call.1} parent=0
    _
  %s8 = ssub.s32 1, %s6
  %s9 = scalar_select 0, %s8, %s6
  %10 = sst [smem:[#allocation2]] %s4
  $region1: #{tpu_custom_call.1} parent=0
    #allocation3 [shape = 'u8[8192]{0}', space=vmem, size = 0x2000, scoped, tag = 'input window, operand 0, single buffered']
    #allocation4 [shape = 's32[1]{0}', space=sflag, size = 0x4, scoped, tag = 'scoped memory for tpu_custom_call.1']
    #allocation5 [shape = 'u8[65536]{0}', space=vmem, size = 0x10000, scoped, tag = 'input window, operand 1, single buffered']
    #allocation6 [shape = 's32[1]{0}', space=sflag, size = 0x4, scoped, tag = 'scoped memory for tpu_custom_call.1']
    %11 = vsyncpa [#allocation4], 0
    %12 = vsyncpa [#allocation6], 0
    // Predicated region
    $region2: #{tpu_custom_call.1} parent=1 // pred_check
      _
    $region3: #{tpu_custom_call.1} parent=1 // pred_check_branch
      %14 = sbr.rel (0) target = $region5
    $region4: #{tpu_custom_call.1} parent=1 // pred_region
      %s16 = ssub.s32 256, 256
      %17 = vsyncadd [#allocation4], %s16
      %s18 = sshll.u32 [#allocation3], 4
      %s19 = int_to_ptr.vmem [resolvable:$true] %s18
      %24 = dma.hbm_to_vmem [thread:$0]  %s0, 256, %s19, [#allocation4], 128, 128, 8
    $region5: #{tpu_custom_call.1} parent=1 // pred_fallthru
      _
    // Predicated region
    $region6: #{tpu_custom_call.1} parent=1 // pred_check
      _
    $region7: #{tpu_custom_call.1} parent=1 // pred_check_branch
      %26 = sbr.rel (0) target = $region9
    $region8: #{tpu_custom_call.1} parent=1 // pred_region
      %s28 = ssub.s32 2048, 2048
      %29 = vsyncadd [#allocation6], %s28
      %s30 = sshll.u32 [#allocation5], 4
      %s31 = int_to_ptr.vmem [resolvable:$true] %s30
      %36 = dma.hbm_to_vmem [thread:$0]  %s1, 2048, %s31, [#allocation6], 64, 64, 4
    $region9: #{tpu_custom_call.1} parent=1 // pred_fallthru
      _
    // Predicated region
    $region10: #{tpu_custom_call.1} parent=1 // pred_check
      _
    $region11: #{tpu_custom_call.1} parent=1 // pred_check_branch
      %38 = sbr.rel (0) target = $region13
    $region12: #{tpu_custom_call.1} parent=1 // pred_region
      _
    $region13: #{tpu_custom_call.1} parent=1 // pred_fallthru
      _
    // Predicated region
    $region14: #{tpu_custom_call.1} parent=1 // pred_check
      _
    $region15: #{tpu_custom_call.1} parent=1 // pred_check_branch
      %40 = sbr.rel (0) target = $region17
    $region16: #{tpu_custom_call.1} parent=1 // pred_region
      _
    $region17: #{tpu_custom_call.1} parent=1 // pred_fallthru
      _
    // Predicated region
    $region18: #{tpu_custom_call.1} parent=1 // pred_check
      _
    $region19: #{tpu_custom_call.1} parent=1 // pred_check_branch
      %42 = sbr.rel (0) target = $region21
    $region20: #{tpu_custom_call.1} parent=1 // pred_region
      _
    $region21: #{tpu_custom_call.1} parent=1 // pred_fallthru
      _
    // Predicated region
    $region22: #{tpu_custom_call.1} parent=1 // pred_check
      _
    $region23: #{tpu_custom_call.1} parent=1 // pred_check_branch
      %44 = sbr.rel (0) target = $region25
    $region24: #{tpu_custom_call.1} parent=1 // pred_region
      %45 = dma.done [#allocation4], 256
    $region25: #{tpu_custom_call.1} parent=1 // pred_fallthru
      _
    // Predicated region
    $region26: #{tpu_custom_call.1} parent=1 // pred_check
      _
    $region27: #{tpu_custom_call.1} parent=1 // pred_check_branch
      %47 = sbr.rel (0) target = $region29
    $region28: #{tpu_custom_call.1} parent=1 // pred_region
      %48 = dma.done [#allocation6], 2048
    $region29: #{tpu_custom_call.1} parent=1 // pred_fallthru
      _
    %v50 = vld [vmem:[#allocation3] sm:$0xff]
    %v51 = vld [vmem:[#allocation3 + $0x8] sm:$0xff]
    %v52 = vld [vmem:[#allocation5] sm:$0xf]
    %v53 = vld [vmem:[#allocation5 + $0x4] sm:$0xf]
    %v54 = vld [vmem:[#allocation5 + $0x8] sm:$0xf]
    %v55 = vld [vmem:[#allocation5 + $0xc] sm:$0xf]
    %v56 = vld [vmem:[#allocation5 + $0x10] sm:$0xf]
    %v57 = vld [vmem:[#allocation5 + $0x14] sm:$0xf]
    %v58 = vld [vmem:[#allocation5 + $0x18] sm:$0xf]
    %v59 = vld [vmem:[#allocation5 + $0x1c] sm:$0xf]
    %v60 = vld [vmem:[#allocation5 + $0x20] sm:$0xf]
    %v61 = vld [vmem:[#allocation5 + $0x24] sm:$0xf]
    %v62 = vld [vmem:[#allocation5 + $0x28] sm:$0xf]
    %v63 = vld [vmem:[#allocation5 + $0x2c] sm:$0xf]
    %v64 = vld [vmem:[#allocation5 + $0x30] sm:$0xf]
    %v65 = vld [vmem:[#allocation5 + $0x34] sm:$0xf]
    %v66 = vld [vmem:[#allocation5 + $0x38] sm:$0xf]
    %v67 = vld [vmem:[#allocation5 + $0x3c] sm:$0xf]
    %v68 = vld [vmem:[#allocation5 + $0x40] sm:$0xf]
    %v69 = vld [vmem:[#allocation5 + $0x44] sm:$0xf]
    %v70 = vld [vmem:[#allocation5 + $0x48] sm:$0xf]
    %v71 = vld [vmem:[#allocation5 + $0x4c] sm:$0xf]
    %v72 = vld [vmem:[#allocation5 + $0x50] sm:$0xf]
    %v73 = vld [vmem:[#allocation5 + $0x54] sm:$0xf]
    %v74 = vld [vmem:[#allocation5 + $0x58] sm:$0xf]
    %v75 = vld [vmem:[#allocation5 + $0x5c] sm:$0xf]
    %v76 = vld [vmem:[#allocation5 + $0x60] sm:$0xf]
    %v77 = vld [vmem:[#allocation5 + $0x64] sm:$0xf]
    %v78 = vld [vmem:[#allocation5 + $0x68] sm:$0xf]
    %v79 = vld [vmem:[#allocation5 + $0x6c] sm:$0xf]
    %v80 = vld [vmem:[#allocation5 + $0x70] sm:$0xf]
    %v81 = vld [vmem:[#allocation5 + $0x74] sm:$0xf]
    %v82 = vld [vmem:[#allocation5 + $0x78] sm:$0xf]
    %v83 = vld [vmem:[#allocation5 + $0x7c] sm:$0xf]
    %v84 = vld [vmem:[%s2] sm:$0x1]
    %v86 = vlaneseq
    %v87 = vshrl.u32 %v86, 7
    %v88 = vsub.s32 0, %v87
    %v89 = vrot.slane %v84, %v88
    %v93 = vunpack.c.l.b16 %v50
    %v94 = vunpack.c.h.b16 %v50
    %v95 = vunpack.c.l.b16 %v51
    %v96 = vunpack.c.h.b16 %v51
    %v97 = vpack.c.b16 %v95, %v93
    %v98 = vpack.c.b16 %v96, %v94
    %v133 = vunpack.c.l.b16 %v52
    %v134 = vunpack.c.l.b16 %v53
    %v135 = vunpack.c.l.b16 %v54
    %v136 = vunpack.c.l.b16 %v55
    %v137 = vunpack.c.l.b16 %v56
    %v138 = vunpack.c.l.b16 %v57
    %v139 = vunpack.c.l.b16 %v58
    %v140 = vunpack.c.l.b16 %v59
    %v141 = vunpack.c.l.b16 %v60
    %v142 = vunpack.c.l.b16 %v61
    %v143 = vunpack.c.l.b16 %v62
    %v144 = vunpack.c.l.b16 %v63
    %v145 = vunpack.c.l.b16 %v64
    %v146 = vunpack.c.l.b16 %v65
    %v147 = vunpack.c.l.b16 %v66
    %v148 = vunpack.c.l.b16 %v67
    %v149 = vunpack.c.l.b16 %v68
    %v150 = vunpack.c.l.b16 %v69
    %v151 = vunpack.c.l.b16 %v70
    %v152 = vunpack.c.l.b16 %v71
    %v153 = vunpack.c.l.b16 %v72
    %v154 = vunpack.c.l.b16 %v73
    %v155 = vunpack.c.l.b16 %v74
    %v156 = vunpack.c.l.b16 %v75
    %v157 = vunpack.c.l.b16 %v76
    %v158 = vunpack.c.l.b16 %v77
    %v159 = vunpack.c.l.b16 %v78
    %v160 = vunpack.c.l.b16 %v79
    %v161 = vunpack.c.l.b16 %v80
    %v162 = vunpack.c.l.b16 %v81
    %v163 = vunpack.c.l.b16 %v82
    %v164 = vunpack.c.l.b16 %v83
    %v165 = vpack.c.b16 %v134, %v133
    %v166 = vpack.c.b16 %v136, %v135
    %v167 = vpack.c.b16 %v138, %v137
    %v168 = vpack.c.b16 %v140, %v139
    %v169 = vpack.c.b16 %v142, %v141
    %v170 = vpack.c.b16 %v144, %v143
    %v171 = vpack.c.b16 %v146, %v145
    %v172 = vpack.c.b16 %v148, %v147
    %v173 = vpack.c.b16 %v150, %v149
    %v174 = vpack.c.b16 %v152, %v151
    %v175 = vpack.c.b16 %v154, %v153
    %v176 = vpack.c.b16 %v156, %v155
    %v177 = vpack.c.b16 %v158, %v157
    %v178 = vpack.c.b16 %v160, %v159
    %v179 = vpack.c.b16 %v162, %v161
    %v180 = vpack.c.b16 %v164, %v163
    %197 = vmatprep.subr.bf16.mxu0 0
    %198 = vmatpush1.bf16.msra.mxu0 %v165
    %199 = vmatprep.subr.bf16.mxu0 0
    %200 = vmatpush1.bf16.msra.mxu0 %v166
    %201 = vmatprep.subr.bf16.mxu0 0
    %202 = vmatpush1.bf16.msra.mxu0 %v167
    %203 = vmatprep.subr.bf16.mxu0 0
    %204 = vmatpush1.bf16.msra.mxu0 %v168
    %205 = vmatprep.subr.bf16.mxu0 0
    %206 = vmatpush1.bf16.msra.mxu0 %v169
    %207 = vmatprep.subr.bf16.mxu0 0
    %208 = vmatpush1.bf16.msra.mxu0 %v170
    %209 = vmatprep.subr.bf16.mxu0 0
    %210 = vmatpush1.bf16.msra.mxu0 %v171
    %211 = vmatprep.subr.bf16.mxu0 0
    %212 = vmatpush1.bf16.msra.mxu0 %v172
    %213 = vmatprep.subr.bf16.mxu0 0
    %214 = vmatpush1.bf16.msra.mxu0 %v173
    %215 = vmatprep.subr.bf16.mxu0 0
    %216 = vmatpush1.bf16.msra.mxu0 %v174
    %217 = vmatprep.subr.bf16.mxu0 0
    %218 = vmatpush1.bf16.msra.mxu0 %v175
    %219 = vmatprep.subr.bf16.mxu0 0
    %220 = vmatpush1.bf16.msra.mxu0 %v176
    %221 = vmatprep.subr.bf16.mxu0 0
    %222 = vmatpush1.bf16.msra.mxu0 %v177
    %223 = vmatprep.subr.bf16.mxu0 0
    %224 = vmatpush1.bf16.msra.mxu0 %v178
    %225 = vmatprep.subr.bf16.mxu0 0
    %226 = vmatpush1.bf16.msra.mxu0 %v179
    %227 = vmatprep.subr.bf16.mxu0 0
    %228 = vmatpush1.bf16.msra.mxu0 %v180
    %229 = vmatprep.mubr.bf16.mxu0 %v98
    %230 = vmatmul.mubr.bf16.gmra.mrb[0].mxu0 %v97
    %v231 = vpop.f32.mrb[0].mxu0
    %v232 = vadd.f32 %v89, %v231
    %v233 = vpop.f32.mrb[0].mxu0
    %v234 = vpop.f32.mrb[0].mxu0
    %v235 = vadd.f32 %v89, %v234
    %v236 = vpop.f32.mrb[0].mxu0
    %237 = vdwg.mxu0
    %v238 = vmax.f32 %v232, 0.0
    %v239 = vmax.f32 %v235, 0.0
    %v240 = vld [vmem:[%s3] sm:$0x1]
    %v242 = vlaneseq
    %v243 = vshrl.u32 %v242, 7
    %v244 = vsub.s32 0, %v243
    %v245 = vrot.slane %v240, %v244
    %v247 = vmul.f32 %v238, %v245
    %v248 = vmul.f32 %v239, %v245
    %249 = vadd.xlane.f32.xlu0 %v247
    %v250 = vpop.xlane.xlu0 %249
    %251 = vadd.xlane.f32.xlu0 %v248
    %v252 = vpop.xlane.xlu0 %251
    %s253 = sld [smem:[#allocation2]]
    %v254 = vstv %s253
    %v255 = vadd.f32 %v250, %v254
    %v256 = vadd.f32 %v252, %v254
    %v257 = vxor.u32 %v255, 2147483648
    %v258 = vxor.u32 %v256, 2147483648
    %v259 = vmul.f32 %v257, 1.442695
    %v260 = vpow.pop %v259
    %v261 = vmul.f32 %v258, 1.442695
    %v262 = vpow.pop %v261
    %v263 = vadd.f32 %v260, 1.0
    %v264 = vadd.f32 %v262, 1.0
    %v265 = vrcp.pop %v263
    %v266 = vmul.f32 1.0, %v265
    %v267 = vrcp.pop %v264
    %v268 = vmul.f32 1.0, %v267
    %vm269 = vcmask 7168
    %270 = vst.msk [vmem:[%s5] sm:$0xff] %vm269, %v266
    %271 = vst.msk [vmem:[%s5 + $0x8] sm:$0xff] %vm269, %v268
    // Predicated region
    $region30: #{tpu_custom_call.1} parent=1 // pred_check
      _
    $region31: #{tpu_custom_call.1} parent=1 // pred_check_branch
      %273 = sbr.rel (0) target = $region33
    $region32: #{tpu_custom_call.1} parent=1 // pred_region
      _
    $region33: #{tpu_custom_call.1} parent=1 // pred_fallthru
      _
    // Predicated region
    $region34: #{tpu_custom_call.1} parent=1 // pred_check
      _
    $region35: #{tpu_custom_call.1} parent=1 // pred_check_branch
      %275 = sbr.rel (0) target = $region37
    $region36: #{tpu_custom_call.1} parent=1 // pred_region
      _
    $region37: #{tpu_custom_call.1} parent=1 // pred_fallthru
      _
    %276 = vsyncpa [#allocation4], 1
    %277 = vsyncpa [#allocation6], 1

</llo_original>
